<compile_context>
chip_gen: v5e
topology: v5e:2x2
jax: 0.10.0
libtpu: 0.0.40
codegen_flags: <defaults>
</compile_context>

<pallas_src>
import jax
import jax.numpy as jnp
import numpy as np
from jax.experimental import pallas as pl
from jax.experimental.pallas import tpu as pltpu


def vfr_kernel(x_ref, cw_ref, cb_ref, attn_ref, acc_ref):
    # x_ref:    [Bt, W, C]  channels-last feature tile (input dtype, unpadded)
    # cw_ref:   [wk, C]     centre row of the conv kernel (input dtype)
    # cb_ref:   [1]         conv bias, SMEM scalar (f32)
    # attn_ref: [Bt, W, C]  attention_feature output (input dtype)
    # acc_ref:  [Bt, W, C]  f32 conv accumulator scratch
    Bt, W, C = x_ref.shape
    wk = cw_ref.shape[0]
    pw = (wk - 1) // 2

    x = x_ref[...]            # single full-tile load, stays in the input dtype
    cw = cw_ref[...]          # [wk, C], input dtype (bf16 stays packed on v6e/v7x)

    # 1-D conv over W using the centre row of the (hk, wk) kernel; H == 1 so the
    # zero-padded H rows contribute nothing.  Boundary taps are handled here
    # (no host-side padding): tap dw with shift s = dw - pw only touches output
    # rows [max(0, -s), W - max(0, s)).
    #
    # Peeled centre tap initializes the accumulator (no zero-fill pass).
    acc_ref[...] = (x * cw[pw][None, None, :]).astype(jnp.float32)
    for dw in range(wk):
        s = dw - pw
        if s == 0:
            continue
        if s > 0:
            prod = (x[:, s:, :] * cw[dw][None, None, :]).astype(jnp.float32)
            acc_ref[:, : W - s, :] = acc_ref[:, : W - s, :] + prod
        else:
            prod = (x[:, : W + s, :] * cw[dw][None, None, :]).astype(jnp.float32)
            acc_ref[:, -s:, :] = acc_ref[:, -s:, :] + prod

    # Single deferred channel reduction (one XLU pass), sigmoid on the EUP.
    conv = jnp.sum(acc_ref[...], axis=-1, keepdims=True) + cb_ref[0]   # [Bt, W, 1]
    mask = jax.nn.sigmoid(conv).astype(x.dtype)                        # [Bt, W, 1]

    # attention_feature = feature * mask, stored back in the input dtype.
    attn_ref[...] = x * mask


def _round_up(x, m):
    return (x + m - 1) // m * m


def _vmem_budget_bytes():
    """Per-generation (tile budget, vmem_limit_bytes).

    v5e / v6e have 128 MiB physical VMEM -> big tiles; v7x only has 64 MiB ->
    stay conservative.  Falls back to the tight setting if the query fails.
    """
    cap = None
    try:
        info = pltpu.get_tpu_info()
        for name in ("vmem_capacity_bytes", "vmem_size_bytes", "vmem_bytes"):
            cap = getattr(info, name, None)
            if cap:
                break
    except Exception:
        cap = None
    if cap is None:
        cap = 64 * 1024 * 1024
    if cap >= 96 * 1024 * 1024:                       # v5e / v6e
        return 48 * 1024 * 1024, 96 * 1024 * 1024
    return 20 * 1024 * 1024, 40 * 1024 * 1024         # v7x


def _batch_tile(B, W, C, in_itemsize, out_itemsize, budget_bytes):
    """Largest batch tile whose double-buffered tiles + f32 scratch fit the budget.

    Accounts for (sublane, lane) tile padding of every slab (W rounded up to the
    dtype's sublane tile, C rounded up to 128 lanes), the f32 accumulator
    scratch, a live per-tap f32 product temporary, and a safety factor for
    slice temporaries / layout slack.
    """
    c_pad = _round_up(C, 128)
    w_in = _round_up(W, max(8, 32 // in_itemsize))
    w_out = _round_up(W, max(8, 32 // out_itemsize))
    w_f32 = _round_up(W, 8)
    per_b = (2 * w_in * c_pad * in_itemsize      # double-buffered input tiles
             + 2 * w_out * c_pad * out_itemsize  # double-buffered output tiles
             + w_f32 * c_pad * 4                 # f32 conv accumulator scratch
             + w_f32 * c_pad * 4)                # live per-tap f32 product temp
    per_b = int(per_b * 1.3)                     # slice temporaries / slack
    bt_budget = max(1, budget_bytes // max(per_b, 1))

    # Keep at least two grid steps when the batch allows it: megacore sharding
    # on v7x and DMA/compute pipeline overlap on every generation.
    if B >= 8:
        min_tiles = 4
    elif B >= 2:
        min_tiles = 2
    else:
        min_tiles = 1
    return int(max(1, min(bt_budget, pl.cdiv(B, min_tiles))))


def visual_features_refinement(x_nchw, conv_w, conv_b, kernel_size=(3, 3)):
    B, C, H, W = x_nchw.shape
    assert H % 2 == 1 and W % 2 == 1      # asserts from the PyTorch forward
    assert H == 1                         # permute(0,3,1,2).squeeze(3) -> [B, W, C]
    # TODO(synk): H > 1 (which the module's squeeze(3) cannot produce anyway)
    # would need the full 2-D conv path; only the H == 1 collapse is implemented.
    hk, wk = kernel_size
    ph = (hk - 1) // 2                    # matches pad_calc for k in {1, 3, 5}

    in_dtype = x_nchw.dtype
    itemsize = jnp.dtype(in_dtype).itemsize

    # NCHW [B, C, 1, W] -> [B, W, C].  No host-side W/B padding; the boundary
    # taps and any ragged last batch tile are handled by the kernel / Pallas.
    # allow_input_fusion lets XLA fold this layout change into the kernel's
    # operand instead of a separate HBM round trip.
    x_bwc = jnp.transpose(x_nchw[:, :, 0, :], (0, 2, 1))              # [B, W, C]

    # Only the centre row (dh == ph) of the conv kernel touches real data when
    # H == 1.  Keep the taps in the activation dtype (packed bf16 VALU on
    # v6e/v7x); the conv accumulates in f32 inside the kernel.
    cw = jnp.transpose(conv_w[0, :, ph, :], (1, 0)).astype(in_dtype)  # [wk, C]
    cb = conv_b.reshape(1).astype(jnp.float32)                        # [1]

    budget, vmem_limit = _vmem_budget_bytes()
    Bt = _batch_tile(B, W, C, itemsize, itemsize, budget)
    n_tiles = pl.cdiv(B, Bt)

    attn = pl.pallas_call(
        vfr_kernel,
        out_shape=jax.ShapeDtypeStruct((B, W, C), in_dtype),
        grid_spec=pltpu.PrefetchScalarGridSpec(
            num_scalar_prefetch=0,
            grid=(n_tiles,),
            in_specs=[
                pl.BlockSpec((Bt, W, C), lambda b: (b, 0, 0)),
                pl.BlockSpec((wk, C), lambda b: (0, 0)),
                pl.BlockSpec(memory_space=pltpu.MemorySpace.SMEM),
            ],
            out_specs=pl.BlockSpec((Bt, W, C), lambda b: (b, 0, 0)),
            scratch_shapes=[pltpu.VMEM((Bt, W, C), jnp.float32)],
        ),
        compiler_params=pltpu.CompilerParams(
            dimension_semantics=("parallel",),
            vmem_limit_bytes=vmem_limit,
            allow_input_fusion=[0],
        ),
    )(x_bwc, cw, cb)

    # The PyTorch forward returns attention_feature only (feature_refined /
    # self.refiner is dead code in the module and intentionally not executed).
    return attn


def vfr_reference(x_nchw, conv_w, conv_b, kernel_size=(3, 3)):
    hk, wk = kernel_size
    ph, pw = (hk - 1) // 2, (wk - 1) // 2
    conv = jax.lax.conv_general_dilated(
        x_nchw.astype(jnp.float32), conv_w.astype(jnp.float32),
        window_strides=(1, 1), padding=((ph, ph), (pw, pw)),
        dimension_numbers=("NCHW", "OIHW", "NCHW"),
        precision=jax.lax.Precision.HIGHEST,
    ) + conv_b.reshape(1, -1, 1, 1)
    mask = jax.nn.sigmoid(conv)
    att = x_nchw.astype(jnp.float32) * mask
    att = jnp.transpose(att, (0, 3, 1, 2))[..., 0]   # permute(0,3,1,2).squeeze(3), H == 1
    return att


if __name__ == "__main__":
    # Small shapes consistent with the module: NCHW, H = 1 (odd), W odd.
    # C = 128 keeps the lane axis dense (the real module uses in_channels=512).
    B, C, H, W = 4, 128, 1, 15
    HK, WK = 3, 3

    key = jax.random.PRNGKey(0)
    kx, kcw, kcb = jax.random.split(key, 3)

    x = jax.random.normal(kx, (B, C, H, W), dtype=jnp.float32)
    conv_w = jax.random.normal(kcw, (1, C, HK, WK), dtype=jnp.float32) * 0.1
    conv_b = jax.random.normal(kcb, (1,), dtype=jnp.float32) * 0.1

    out = visual_features_refinement(x, conv_w, conv_b, kernel_size=(HK, WK))
    out = jax.block_until_ready(out)

    ref = jax.block_until_ready(vfr_reference(x, conv_w, conv_b, (HK, WK)))
    np.testing.assert_allclose(np.asarray(out), np.asarray(ref),
                               rtol=1e-4, atol=1e-5)

    print("KERNEL_OK")
</pallas_src>

<mosaic_0001>
module attributes {stable_mosaic.version = 11 : i64} {
  func.func @vfr_kernel(%arg0: i32, %arg1: memref<2x15x128xf32, #tpu.memory_space<vmem>>, %arg2: memref<3x128xf32, #tpu.memory_space<vmem>>, %arg3: memref<1xf32, #tpu.memory_space<smem>>, %arg4: memref<2x15x128xf32, #tpu.memory_space<vmem>>, %arg5: memref<2x15x128xf32, #tpu.memory_space<vmem>>) attributes {dimension_semantics = [#tpu.dimension_semantics<parallel>], iteration_bounds = array<i64: 2>, scalar_prefetch = 0 : i64, scratch_operands = 1 : i64, tpu.core_type = #tpu.core_type<tc>, window_params = [{transform_indices = @transform_0, window_bounds = array<i64: 2, 15, 128>}, {pipeline_mode = #tpu.pipeline_mode<synchronous>, transform_indices = @transform_1, window_bounds = array<i64: 3, 128>}, {transform_indices = @transform_2, window_bounds = array<i64: 1>}, {transform_indices = @transform_3, window_bounds = array<i64: 2, 15, 128>}]} {
    %c0 = arith.constant 0 : index
    %c0_0 = arith.constant 0 : index
    %c0_1 = arith.constant 0 : index
    %0 = vector.load %arg1[%c0, %c0_0, %c0_1] : memref<2x15x128xf32, #tpu.memory_space<vmem>>, vector<2x15x128xf32>
    %c0_2 = arith.constant 0 : index
    %c0_3 = arith.constant 0 : index
    %1 = vector.load %arg2[%c0_2, %c0_3] : memref<3x128xf32, #tpu.memory_space<vmem>>, vector<3x128xf32>
    %2 = vector.extract_strided_slice %1 {offsets = [1, 0], sizes = [1, 128], strides = [1, 1]} : vector<3x128xf32> to vector<1x128xf32>
    %3 = vector.shape_cast %2 : vector<1x128xf32> to vector<128xf32>
    %4 = vector.shape_cast %3 : vector<128xf32> to vector<1x1x128xf32>
    %5 = vector.broadcast %4 : vector<1x1x128xf32> to vector<2x15x128xf32>
    %6 = arith.mulf %0, %5 : vector<2x15x128xf32>
    %c0_4 = arith.constant 0 : index
    %c0_5 = arith.constant 0 : index
    %c0_6 = arith.constant 0 : index
    %7 = vector.load %arg5[%c0_4, %c0_5, %c0_6] : memref<2x15x128xf32, #tpu.memory_space<vmem>>, vector<2x15x128xf32>
    tpu.vector_store %arg5[%c0_4, %c0_5, %c0_6], %6 {strides = array<i32>} : memref<2x15x128xf32, #tpu.memory_space<vmem>>, vector<2x15x128xf32>,
    %8 = vector.extract_strided_slice %0 {offsets = [0, 0, 0], sizes = [2, 14, 128], strides = [1, 1, 1]} : vector<2x15x128xf32> to vector<2x14x128xf32>
    %9 = vector.extract_strided_slice %1 {offsets = [0, 0], sizes = [1, 128], strides = [1, 1]} : vector<3x128xf32> to vector<1x128xf32>
    %10 = vector.shape_cast %9 : vector<1x128xf32> to vector<128xf32>
    %11 = vector.shape_cast %10 : vector<128xf32> to vector<1x1x128xf32>
    %12 = vector.broadcast %11 : vector<1x1x128xf32> to vector<2x14x128xf32>
    %13 = arith.mulf %8, %12 : vector<2x14x128xf32>
    %c0_7 = arith.constant 0 : index
    %c1 = arith.constant 1 : index
    %c0_8 = arith.constant 0 : index
    %14 = vector.load %arg5[%c0_7, %c1, %c0_8] : memref<2x15x128xf32, #tpu.memory_space<vmem>>, vector<2x14x128xf32>
    %15 = arith.addf %14, %13 : vector<2x14x128xf32>
    %c0_9 = arith.constant 0 : index
    %c1_10 = arith.constant 1 : index
    %c0_11 = arith.constant 0 : index
    %16 = vector.load %arg5[%c0_9, %c1_10, %c0_11] : memref<2x15x128xf32, #tpu.memory_space<vmem>>, vector<2x14x128xf32>
    tpu.vector_store %arg5[%c0_9, %c1_10, %c0_11], %15 {strides = array<i32>} : memref<2x15x128xf32, #tpu.memory_space<vmem>>, vector<2x14x128xf32>,
    %17 = vector.extract_strided_slice %0 {offsets = [0, 1, 0], sizes = [2, 14, 128], strides = [1, 1, 1]} : vector<2x15x128xf32> to vector<2x14x128xf32>
    %18 = vector.extract_strided_slice %1 {offsets = [2, 0], sizes = [1, 128], strides = [1, 1]} : vector<3x128xf32> to vector<1x128xf32>
    %19 = vector.shape_cast %18 : vector<1x128xf32> to vector<128xf32>
    %20 = vector.shape_cast %19 : vector<128xf32> to vector<1x1x128xf32>
    %21 = vector.broadcast %20 : vector<1x1x128xf32> to vector<2x14x128xf32>
    %22 = arith.mulf %17, %21 : vector<2x14x128xf32>
    %c0_12 = arith.constant 0 : index
    %c0_13 = arith.constant 0 : index
    %c0_14 = arith.constant 0 : index
    %23 = vector.load %arg5[%c0_12, %c0_13, %c0_14] : memref<2x15x128xf32, #tpu.memory_space<vmem>>, vector<2x14x128xf32>
    %24 = arith.addf %23, %22 : vector<2x14x128xf32>
    %c0_15 = arith.constant 0 : index
    %c0_16 = arith.constant 0 : index
    %c0_17 = arith.constant 0 : index
    %25 = vector.load %arg5[%c0_15, %c0_16, %c0_17] : memref<2x15x128xf32, #tpu.memory_space<vmem>>, vector<2x14x128xf32>
    tpu.vector_store %arg5[%c0_15, %c0_16, %c0_17], %24 {strides = array<i32>} : memref<2x15x128xf32, #tpu.memory_space<vmem>>, vector<2x14x128xf32>,
    %c0_18 = arith.constant 0 : index
    %c0_19 = arith.constant 0 : index
    %c0_20 = arith.constant 0 : index
    %26 = vector.load %arg5[%c0_18, %c0_19, %c0_20] : memref<2x15x128xf32, #tpu.memory_space<vmem>>, vector<2x15x128xf32>
    %cst = arith.constant dense<0.000000e+00> : vector<2x15xf32>
    %27 = vector.multi_reduction <add>, %26, %cst [2] : vector<2x15x128xf32> to vector<2x15xf32>
    %28 = vector.shape_cast %27 : vector<2x15xf32> to vector<2x15x1xf32>
    %c0_21 = arith.constant 0 : index
    %29 = memref.load %arg3[%c0_21] : memref<1xf32, #tpu.memory_space<smem>>
    %30 = vector.broadcast %29 : f32 to vector<2x15x1xf32>
    %31 = arith.addf %28, %30 : vector<2x15x1xf32>
    %32 = arith.negf %31 : vector<2x15x1xf32>
    %33 = math.exp %32 : vector<2x15x1xf32>
    %cst_22 = arith.constant 1.000000e+00 : f32
    %34 = vector.broadcast %cst_22 : f32 to vector<2x15x1xf32>
    %35 = arith.addf %34, %33 : vector<2x15x1xf32>
    %36 = arith.divf %34, %35 : vector<2x15x1xf32>
    %37 = vector.broadcast %36 : vector<2x15x1xf32> to vector<2x15x128xf32>
    %38 = arith.mulf %0, %37 : vector<2x15x128xf32>
    %c0_23 = arith.constant 0 : index
    %c0_24 = arith.constant 0 : index
    %c0_25 = arith.constant 0 : index
    %39 = vector.load %arg4[%c0_23, %c0_24, %c0_25] : memref<2x15x128xf32, #tpu.memory_space<vmem>>, vector<2x15x128xf32>
    tpu.vector_store %arg4[%c0_23, %c0_24, %c0_25], %38 {strides = array<i32>} : memref<2x15x128xf32, #tpu.memory_space<vmem>>, vector<2x15x128xf32>,
    return
  }
  func.func @transform_0(%arg0: i32) -> (i32, i32, i32) {
    %c0_i32 = arith.constant 0 : i32
    %c0_i32_0 = arith.constant 0 : i32
    %c0_i32_1 = arith.constant 0 : i32
    return %arg0, %c0_i32, %c0_i32_0 : i32, i32, i32
  }
  func.func @transform_1(%arg0: i32) -> (i32, i32) {
    %c0_i32 = arith.constant 0 : i32
    %c0_i32_0 = arith.constant 0 : i32
    %c0_i32_1 = arith.constant 0 : i32
    return %c0_i32, %c0_i32_0 : i32, i32
  }
  func.func @transform_2(%arg0: i32) -> i32 {
    %c0_i32 = arith.constant 0 : i32
    %c0_i32_0 = arith.constant 0 : i32
    return %c0_i32 : i32
  }
  func.func @transform_3(%arg0: i32) -> (i32, i32, i32) {
    %c0_i32 = arith.constant 0 : i32
    %c0_i32_0 = arith.constant 0 : i32
    %c0_i32_1 = arith.constant 0 : i32
    return %arg0, %c0_i32, %c0_i32_0 : i32, i32, i32
  }
}

</mosaic_0001>

<llo_original>
// kernel: tpu_custom_call.1
$region0: #{tpu_custom_call.1}
  #allocation0 [shape = 'u32[]', space=smem, size = 0x4, offset = 0x4, fixed_abs, tag = 'smem constant byte address 0x4 - core index']
  #allocation1 [shape = 'u32[72,128]{1,0:T(1,128)}', space=vmem, size = 0x9000, scoped, tag = 'internal scratch']
  #allocation2 [shape = 'f32[2,15,128]{2,1,0:T(8,128)}', space=vmem, size = 0x4000, scoped, tag = 'scratch operand']
  #allocation3 [shape = 'f32[1]{0:T(128)S(6)}', space=smem, size = 0x200, scoped, tag = 'scoped memory for tpu_custom_call.1']
  %s0 = inlined_call_operand.vmem [shape: f32[4,15,128], index: 0, kind: input, shape index: {}]
  %s1 = inlined_call_operand.vmem [shape: f32[3,128], index: 1, kind: input, shape index: {}]
  %s2 = inlined_call_operand.<no memory space> [shape: f32[1], index: 2, kind: input, shape index: {}]
  %s3 = inlined_call_operand.vmem [shape: f32[4,15,128], index: 3, kind: output, shape index: {}]
  %s4 = sld [smem:[#allocation0]]
  $region45: #{tpu_custom_call.1} parent=0
    _
  %s6 = ssub.s32 1, %s4
  %s7 = scalar_select 0, %s6, %s4
  %8 = sst [smem:[#allocation3]] %s2
  loop: start=0, step=1, limit=4
  $region2: #{tpu_custom_call.1} parent=0 // loop_pre_header
    _
  $region3: #{tpu_custom_call.1} parent=0 // loop_header
    %s10 = sphi 0, %s14
    %p11 = scmp.ge.s32.totalorder %s10, 4
    %s20 = sphi 0, %s22
    %s23 = sphi 0, %s20
    %s24 = sphi 0, %s23
    %s40 = sphi 0, %s24
    %s44 = sphi 0, %s44
    %s46 = sphi 0, %s44
    %s47 = sphi 0, %s46
    %s61 = sphi 0, %s47
    %s65 = sphi 0, %s65
    %s67 = sphi 0, %s65
    %s68 = sphi 0, %s67
    %s82 = sphi 0, %s68
    %s88 = sphi 0, %s90
    %s91 = sphi 0, %s88
    %s92 = sphi 0, %s91
    %s108 = sphi 0, %s92
  $region4: #{tpu_custom_call.1} parent=0 // loop_header_branch
    %13 = sbr.rel (%p11) target = $region8
  $region5: #{tpu_custom_call.1} parent=0 // loop_body
    %s15 = ssub.s32 %s10, 1
    %s16 = ssub.s32 %s10, 2
    %s17 = sadd.s32 %s10, 1
    %s18 = ssub.s32 %s10, %s17
    %p19 = scmp.eq.s32.totalorder %s18, 0
    %s21 = sadd.s32 %s20, 1
    %s22 = scalar_select %p19, %s20, %s21
    %p25 = pneg %p19
    %p26 = scmp.eq.s32.totalorder %s10, 1
    %p27 = por %p25, %p26
    %p28 = scmp.ne.s32.totalorder %s20, %s23
    %p29 = scmp.eq.s32.totalorder %s10, 0
    %p30 = por %p28, %p29
    %p31 = scmp.ne.s32.totalorder %s20, %s23
    %p32 = scmp.eq.s32.totalorder %s15, 1
    %p33 = por %p31, %p32
    %p34 = scmp.ne.s32.totalorder %s23, %s24
    %p35 = scmp.eq.s32.totalorder %s15, 0
    %p36 = por %p34, %p35
    %p37 = scmp.ne.s32.totalorder %s23, %s24
    %p38 = scmp.eq.s32.totalorder %s16, 1
    %p39 = por %p37, %p38
    %p41 = scmp.ne.s32.totalorder %s24, %s40
    %p42 = scmp.eq.s32.totalorder %s16, 0
    %p43 = por %p41, %p42
    %s45 = sadd.s32 %s44, 1
    %p48 = scmp.eq.s32.totalorder %s10, 1
    %p49 = scmp.ne.s32.totalorder %s44, %s46
    %p50 = scmp.eq.s32.totalorder %s10, 0
    %p51 = por %p49, %p50
    %p52 = scmp.ne.s32.totalorder %s44, %s46
    %p53 = scmp.eq.s32.totalorder %s15, 1
    %p54 = por %p52, %p53
    %p55 = scmp.ne.s32.totalorder %s46, %s47
    %p56 = scmp.eq.s32.totalorder %s15, 0
    %p57 = por %p55, %p56
    %p58 = scmp.ne.s32.totalorder %s46, %s47
    %p59 = scmp.eq.s32.totalorder %s16, 1
    %p60 = por %p58, %p59
    %p62 = scmp.ne.s32.totalorder %s47, %s61
    %p63 = scmp.eq.s32.totalorder %s16, 0
    %p64 = por %p62, %p63
    %s66 = sadd.s32 %s65, 1
    %p69 = scmp.eq.s32.totalorder %s10, 1
    %p70 = scmp.ne.s32.totalorder %s65, %s67
    %p71 = scmp.eq.s32.totalorder %s10, 0
    %p72 = por %p70, %p71
    %p73 = scmp.ne.s32.totalorder %s65, %s67
    %p74 = scmp.eq.s32.totalorder %s15, 1
    %p75 = por %p73, %p74
    %p76 = scmp.ne.s32.totalorder %s67, %s68
    %p77 = scmp.eq.s32.totalorder %s15, 0
    %p78 = por %p76, %p77
    %p79 = scmp.ne.s32.totalorder %s67, %s68
    %p80 = scmp.eq.s32.totalorder %s16, 1
    %p81 = por %p79, %p80
    %p83 = scmp.ne.s32.totalorder %s68, %s82
    %p84 = scmp.eq.s32.totalorder %s16, 0
    %p85 = por %p83, %p84
    %s86 = ssub.s32 %s10, %s17
    %p87 = scmp.eq.s32.totalorder %s86, 0
    %s89 = sadd.s32 %s88, 1
    %s90 = scalar_select %p87, %s88, %s89
    %p93 = pneg %p87
    %p94 = scmp.eq.s32.totalorder %s10, 1
    %p95 = por %p93, %p94
    %p96 = scmp.ne.s32.totalorder %s88, %s91
    %p97 = scmp.eq.s32.totalorder %s10, 0
    %p98 = por %p96, %p97
    %p99 = scmp.ne.s32.totalorder %s88, %s91
    %p100 = scmp.eq.s32.totalorder %s15, 1
    %p101 = por %p99, %p100
    %p102 = scmp.ne.s32.totalorder %s91, %s92
    %p103 = scmp.eq.s32.totalorder %s15, 0
    %p104 = por %p102, %p103
    %p105 = scmp.ne.s32.totalorder %s91, %s92
    %p106 = scmp.eq.s32.totalorder %s16, 1
    %p107 = por %p105, %p106
    %p109 = scmp.ne.s32.totalorder %s92, %s108
    %p110 = scmp.eq.s32.totalorder %s16, 0
    %p111 = por %p109, %p110
    %p112 = scmp.le.s32.totalorder 1, %s10
    %p113 = scmp.lt.s32.totalorder %s10, 3
    %p114 = pnand %p112, %p113
    %p115 = pneg %p114
    // Predicated region
    $region9: #{tpu_custom_call.1} parent=5 // pred_check
      _
    $region10: #{tpu_custom_call.1} parent=5 // pred_check_branch
      %117 = sbr.rel (%p114) target = $region12
    $region11: #{tpu_custom_call.1} parent=5 // pred_region
      %s118 = ssub.s32 %s10, 1
      // Predicated region
      $region13: #{tpu_custom_call.1} parent=11 // pred_check
        %p119 = pneg %p57
      $region14: #{tpu_custom_call.1} parent=11 // pred_check_branch
        %121 = sbr.rel (%p119) target = $region16
      $region15: #{tpu_custom_call.1} parent=11 // pred_region
        _
      $region16: #{tpu_custom_call.1} parent=11 // pred_fallthru
        _
      // Predicated region
      $region17: #{tpu_custom_call.1} parent=11 // pred_check
        %p122 = pneg %p78
      $region18: #{tpu_custom_call.1} parent=11 // pred_check_branch
        %124 = sbr.rel (%p122) target = $region20
      $region19: #{tpu_custom_call.1} parent=11 // pred_region
        _
      $region20: #{tpu_custom_call.1} parent=11 // pred_fallthru
        _
    $region12: #{tpu_custom_call.1} parent=5 // pred_fallthru
      _
    %p125 = scmp.lt.s32.totalorder %s10, 2
    // Predicated region
    $region21: #{tpu_custom_call.1} parent=5 // pred_check
      %p126 = pneg %p125
    $region22: #{tpu_custom_call.1} parent=5 // pred_check_branch
      %128 = sbr.rel (%p126) target = $region24
    $region23: #{tpu_custom_call.1} parent=5 // pred_region
      // Predicated region
      $region25: #{tpu_custom_call.1} parent=23 // pred_check
        %p129 = pneg %p30
      $region26: #{tpu_custom_call.1} parent=23 // pred_check_branch
        %131 = sbr.rel (%p129) target = $region28
      $region27: #{tpu_custom_call.1} parent=23 // pred_region
        %s132 = smul.u32 2, %s10
        %p133 = scmp.lt.s32.totalorder %s132, 3
        %s134 = scalar_select %p133, %s132, 3
        %s135 = smul.addr %s134, 2
        %s136 = smul.addr %s135, 8
        %s137 = scalar_lea.vmem %s0, %s136
        %s138 = smul.u32 2, %s10
      $region28: #{tpu_custom_call.1} parent=23 // pred_fallthru
        _
    $region24: #{tpu_custom_call.1} parent=5 // pred_fallthru
      _
    %p139 = scmp.le.s32.totalorder 1, %s10
    %p140 = scmp.lt.s32.totalorder %s10, 3
    %p141 = pnand %p139, %p140
    %p142 = pneg %p141
    // Predicated region
    $region29: #{tpu_custom_call.1} parent=5 // pred_check
      _
    $region30: #{tpu_custom_call.1} parent=5 // pred_check_branch
      %144 = sbr.rel (%p141) target = $region32
    $region31: #{tpu_custom_call.1} parent=5 // pred_region
      %s145 = ssub.s32 %s10, 1
      %s146 = smul.u32 2, %s15
      %p147 = scmp.lt.s32.totalorder %s146, 3
      %s148 = scalar_select %p147, %s146, 3
      %s149 = smul.addr %s148, 2
      %s150 = smul.addr %s149, 8
      %s151 = scalar_lea.vmem %s0, %s150
      %p152 = pneg %p36
      %p153 = pneg %p33
      %p154 = pneg %p57
      %p155 = pneg %p54
      %p156 = pneg %p78
      %p157 = pneg %p75
      %p158 = pneg %p104
      %p159 = pneg %p101
      %s160 = smul.u32 2, %s15
      %p161 = scmp.lt.s32.totalorder %s160, 3
      %s162 = scalar_select %p161, %s160, 3
      %s163 = smul.addr %s162, 2
      %s164 = smul.addr %s163, 8
      %s165 = scalar_lea.vmem %s3, %s164
      %s166 = smul.u32 2, %s15
      %p167 = scmp.lt.s32.totalorder %s166, 3
      %s168 = scalar_select %p167, %s166, 3
      %s169 = smul.addr %s168, 2
      %s170 = smul.addr %s169, 8
      %s171 = scalar_lea.vmem %s0, %s170
      %s172 = smul.u32 2, %s15
      %s173 = smul.u32 2, %s15
      %p174 = scmp.lt.s32.totalorder %s173, 3
      %s175 = scalar_select %p174, %s173, 3
      %s176 = smul.addr %s175, 2
      %s177 = smul.addr %s176, 8
      %s178 = scalar_lea.vmem %s3, %s177
      %s179 = smul.u32 2, %s15
      %v180 = vld [vmem:[%s171] sm:$0xff]
      %v181 = vld [vmem:[%s171 + $0x8] sm:$0x7f]
      %v182 = vld [vmem:[%s171 + $0x10] sm:$0xff]
      %v183 = vld [vmem:[%s171 + $0x18] sm:$0x7f]
      %v184 = vld [vmem:[%s1] sm:$0x7]
      %v185 = vperm.slane %v184, 1
      %v186 = vmul.f32 %v180, %v185
      %v187 = vmul.f32 %v181, %v185
      %v188 = vmul.f32 %v182, %v185
      %v189 = vmul.f32 %v183, %v185
      %190 = vst [vmem:[#allocation2] sm:$0xff] %v186
      %191 = vst [vmem:[#allocation2 + $0x8] sm:$0x7f] %v187
      %192 = vst [vmem:[#allocation2 + $0x10] sm:$0xff] %v188
      %193 = vst [vmem:[#allocation2 + $0x18] sm:$0x7f] %v189
      %v194 = vperm.slane %v184, 0
      %v195 = vmul.f32 %v180, %v194
      %v196 = vmul.f32 %v181, %v194
      %v197 = vmul.f32 %v182, %v194
      %v198 = vmul.f32 %v183, %v194
      %v199 = vld [vmem:[#allocation2 + $0x1] sm:$0xff]
      %v200 = vld [vmem:[#allocation2 + $0x9] sm:$0x3f]
      %v201 = vld [vmem:[#allocation2 + $0x11] sm:$0xff]
      %v202 = vld [vmem:[#allocation2 + $0x19] sm:$0x3f]
      %v203 = vadd.f32 %v199, %v195
      %v204 = vadd.f32 %v200, %v196
      %v205 = vadd.f32 %v201, %v197
      %v206 = vadd.f32 %v202, %v198
      %207 = vst [vmem:[#allocation2 + $0x1] sm:$0xff] %v203
      %208 = vst [vmem:[#allocation2 + $0x9] sm:$0x3f] %v204
      %209 = vst [vmem:[#allocation2 + $0x11] sm:$0xff] %v205
      %210 = vst [vmem:[#allocation2 + $0x19] sm:$0x3f] %v206
      %v211 = vperm.slane %v184, 2
      %v212 = vmul.f32 %v180, %v211
      %v213 = vmul.f32 %v181, %v211
      %v214 = vmul.f32 %v182, %v211
      %v215 = vmul.f32 %v183, %v211
      %v216 = vld [vmem:[#allocation2] sm:$0xff]
      %v217 = vld [vmem:[#allocation2 + $0x8] sm:$0x3f]
      %v218 = vld [vmem:[#allocation2 + $0x10] sm:$0xff]
      %v219 = vld [vmem:[#allocation2 + $0x18] sm:$0x3f]
      %vm224 = vcmask 1046528
      %v225 = vrot.slane %v212, 1
      %v226 = vrot.slane %v213, 1
      %v227 = vsel %vm224, %v225, %v226
      %v228 = vrot.slane %v214, 1
      %v229 = vrot.slane %v215, 1
      %v230 = vsel %vm224, %v228, %v229
      %v235 = vadd.f32 %v216, %v227
      %v236 = vadd.f32 %v217, %v226
      %v237 = vadd.f32 %v218, %v230
      %v238 = vadd.f32 %v219, %v229
      %239 = vst [vmem:[#allocation2] sm:$0xff] %v235
      %240 = vst [vmem:[#allocation2 + $0x8] sm:$0x3f] %v236
      %241 = vst [vmem:[#allocation2 + $0x10] sm:$0xff] %v237
      %242 = vst [vmem:[#allocation2 + $0x18] sm:$0x3f] %v238
      %v243 = vld [vmem:[#allocation2] sm:$0xff]
      %v244 = vld [vmem:[#allocation2 + $0x8] sm:$0x7f]
      %v245 = vld [vmem:[#allocation2 + $0x10] sm:$0xff]
      %v246 = vld [vmem:[#allocation2 + $0x18] sm:$0x7f]
      %247 = vadd.xlane.f32.xlu0 %v243
      %v248 = vpop.xlane.xlu0 %247
      %v249 = vsel %vm224, %v244, 0.0
      %250 = vadd.xlane.f32.xlu0 %v249
      %v251 = vpop.xlane.xlu0 %250
      %252 = vadd.xlane.f32.xlu0 %v245
      %v253 = vpop.xlane.xlu0 %252
      %v254 = vsel %vm224, %v246, 0.0
      %255 = vadd.xlane.f32.xlu0 %v254
      %v256 = vpop.xlane.xlu0 %255
      %s257 = sld [smem:[#allocation3]]
      %v258 = vstv %s257
      %v259 = vadd.f32 %v248, %v258
      %v260 = vadd.f32 %v251, %v258
      %v261 = vadd.f32 %v253, %v258
      %v262 = vadd.f32 %v256, %v258
      %v263 = vxor.u32 %v259, 2147483648
      %v264 = vxor.u32 %v260, 2147483648
      %v265 = vxor.u32 %v261, 2147483648
      %v266 = vxor.u32 %v262, 2147483648
      %v267 = vmul.f32 %v263, 1.442695
      %v268 = vpow.pop %v267
      %v269 = vmul.f32 %v264, 1.442695
      %v270 = vpow.pop %v269
      %v271 = vmul.f32 %v265, 1.442695
      %v272 = vpow.pop %v271
      %v273 = vmul.f32 %v266, 1.442695
      %v274 = vpow.pop %v273
      %v275 = vadd.f32 %v268, 1.0
      %v276 = vadd.f32 %v270, 1.0
      %v277 = vadd.f32 %v272, 1.0
      %v278 = vadd.f32 %v274, 1.0
      %v279 = vrcp.pop %v275
      %v280 = vmul.f32 %v275, %v279
      %v281 = vsub.f32 1.0, %v280
      %v282 = vmul.f32 %v279, %v281
      %v283 = vadd.f32 %v279, %v282
      %vm284 = vweird.f32 %v275
      %vm285 = vweird.f32 %v279
      %vm286 = vmor %vm284, %vm285
      %v287 = vsel %vm286, %v279, %v283
      %v288 = vand.u32 2147483647, %v275
      %vm289 = vcmp.eq.f32.partialorder %v288, 8.507059e+37
      %v290 = vand.u32 %v275, 2147483648
      %v291 = vor.u32 1.1754944e-38, %v290
      %v292 = vsel %vm289, %v291, %v287
      %v293 = vmul.f32 1.0, %v292
      %v294 = vrcp.pop %v276
      %v295 = vmul.f32 %v276, %v294
      %v296 = vsub.f32 1.0, %v295
      %v297 = vmul.f32 %v294, %v296
      %v298 = vadd.f32 %v294, %v297
      %vm299 = vweird.f32 %v276
      %vm300 = vweird.f32 %v294
      %vm301 = vmor %vm299, %vm300
      %v302 = vsel %vm301, %v294, %v298
      %v303 = vand.u32 2147483647, %v276
      %vm304 = vcmp.eq.f32.partialorder %v303, 8.507059e+37
      %v305 = vand.u32 %v276, 2147483648
      %v306 = vor.u32 1.1754944e-38, %v305
      %v307 = vsel %vm304, %v306, %v302
      %v308 = vmul.f32 1.0, %v307
      %v309 = vrcp.pop %v277
      %v310 = vmul.f32 %v277, %v309
      %v311 = vsub.f32 1.0, %v310
      %v312 = vmul.f32 %v309, %v311
      %v313 = vadd.f32 %v309, %v312
      %vm314 = vweird.f32 %v277
      %vm315 = vweird.f32 %v309
      %vm316 = vmor %vm314, %vm315
      %v317 = vsel %vm316, %v309, %v313
      %v318 = vand.u32 2147483647, %v277
      %vm319 = vcmp.eq.f32.partialorder %v318, 8.507059e+37
      %v320 = vand.u32 %v277, 2147483648
      %v321 = vor.u32 1.1754944e-38, %v320
      %v322 = vsel %vm319, %v321, %v317
      %v323 = vmul.f32 1.0, %v322
      %v324 = vrcp.pop %v278
      %v325 = vmul.f32 %v278, %v324
      %v326 = vsub.f32 1.0, %v325
      %v327 = vmul.f32 %v324, %v326
      %v328 = vadd.f32 %v324, %v327
      %vm329 = vweird.f32 %v278
      %vm330 = vweird.f32 %v324
      %vm331 = vmor %vm329, %vm330
      %v332 = vsel %vm331, %v324, %v328
      %v333 = vand.u32 2147483647, %v278
      %vm334 = vcmp.eq.f32.partialorder %v333, 8.507059e+37
      %v335 = vand.u32 %v278, 2147483648
      %v336 = vor.u32 1.1754944e-38, %v335
      %v337 = vsel %vm334, %v336, %v332
      %v338 = vmul.f32 1.0, %v337
      %v339 = vmul.f32 %v180, %v293
      %v340 = vmul.f32 %v181, %v308
      %v341 = vmul.f32 %v182, %v323
      %v342 = vmul.f32 %v183, %v338
      %343 = vst [vmem:[%s178] sm:$0xff] %v339
      %344 = vst [vmem:[%s178 + $0x8] sm:$0x7f] %v340
      %345 = vst [vmem:[%s178 + $0x10] sm:$0xff] %v341
      %346 = vst [vmem:[%s178 + $0x18] sm:$0x7f] %v342
      %s347 = smul.u32 2, %s15
      %p348 = scmp.lt.s32.totalorder %s347, 3
      %s349 = scalar_select %p348, %s347, 3
      %s350 = smul.addr %s349, 2
      %s351 = smul.addr %s350, 8
      %s352 = scalar_lea.vmem %s3, %s351
      // Predicated region
      $region33: #{tpu_custom_call.1} parent=31 // pred_check
        %p353 = pneg %p101
      $region34: #{tpu_custom_call.1} parent=31 // pred_check_branch
        %355 = sbr.rel (%p353) target = $region36
      $region35: #{tpu_custom_call.1} parent=31 // pred_region
        %s356 = smul.u32 2, %s15
      $region36: #{tpu_custom_call.1} parent=31 // pred_fallthru
        _
    $region32: #{tpu_custom_call.1} parent=5 // pred_fallthru
      _
    %p357 = scmp.le.s32.totalorder 2, %s10
    // Predicated region
    $region37: #{tpu_custom_call.1} parent=5 // pred_check
      %p358 = pneg %p357
    $region38: #{tpu_custom_call.1} parent=5 // pred_check_branch
      %360 = sbr.rel (%p358) target = $region40
    $region39: #{tpu_custom_call.1} parent=5 // pred_region
      %s361 = ssub.s32 %s10, 2
      // Predicated region
      $region41: #{tpu_custom_call.1} parent=39 // pred_check
        %p362 = pneg %p107
      $region42: #{tpu_custom_call.1} parent=39 // pred_check_branch
        %364 = sbr.rel (%p362) target = $region44
      $region43: #{tpu_custom_call.1} parent=39 // pred_region
        %s365 = smul.u32 2, %s16
        %p366 = scmp.lt.s32.totalorder %s365, 3
        %s367 = scalar_select %p366, %s365, 3
        %s368 = smul.addr %s367, 2
        %s369 = smul.addr %s368, 8
        %s370 = scalar_lea.vmem %s3, %s369
      $region44: #{tpu_custom_call.1} parent=39 // pred_fallthru
        _
    $region40: #{tpu_custom_call.1} parent=5 // pred_fallthru
      _
  $region6: #{tpu_custom_call.1} parent=0 // loop_footer
    %s14 = sadd.s32 1, %s10
  $region7: #{tpu_custom_call.1} parent=0 // loop_footer_branch
    %9 = sbr.rel target = $region3
  $region8: #{tpu_custom_call.1} parent=0 // loop_exit
    _

</llo_original>
